<compile_context>
chip_gen: v7x
topology: tpu7x:2x2x1
jax: 0.10.0
libtpu: 0.0.40
codegen_flags: <defaults>
</compile_context>

<pallas_src>
import math

import jax
import jax.numpy as jnp
import numpy as np
from jax.experimental import pallas as pl
from jax.experimental.pallas import tpu as pltpu


# ----------------------------------------------------------------------------
# Tile-size helpers.
# ----------------------------------------------------------------------------
def _pick_block(dim, target, align):
    """Largest multiple-of-`align` divisor of `dim` that is <= target, else full dim."""
    if dim <= target:
        return dim
    t = (target // align) * align
    while t >= align:
        if dim % t == 0:
            return t
        t -= align
    return dim


def _pick_time_chunk(T, B, G, budget_bytes=4 * 1024 * 1024, max_chunk=32):
    """Largest divisor of T that keeps one (Tc, B, G) f32 gate chunk under budget
    and the in-kernel unroll bounded."""
    per_t = max(B * G * 4, 1)
    tc = max(1, min(T, max_chunk, budget_bytes // per_t))
    while T % tc:
        tc -= 1
    return tc


# ----------------------------------------------------------------------------
# Tiled matmul + bias kernel (hoisted LSTM input projection and decoder).
# grid = (M/tm, N/tn, K/tk) with an f32 VMEM accumulator; reduction axis last.
# ----------------------------------------------------------------------------
def matmul_bias_kernel(x_ref, w_ref, b_ref, o_ref, acc_ref):
    @pl.when(pl.program_id(2) == 0)
    def _():
        acc_ref[...] = jnp.zeros_like(acc_ref)

    acc_ref[...] += jnp.dot(x_ref[...], w_ref[...],
                            preferred_element_type=jnp.float32)

    @pl.when(pl.program_id(2) == pl.num_programs(2) - 1)
    def _():
        o_ref[...] = (acc_ref[...] + b_ref[...]).astype(o_ref.dtype)


def matmul_bias(x, w_t, b_row, *, tm=256, tn=512, tk=512):
    """x: (M, K), w_t: (K, N) pre-transposed, b_row: (1, N) -> (M, N) f32."""
    M, K = x.shape
    N = w_t.shape[1]
    tm = _pick_block(M, tm, 8)
    tn = _pick_block(N, tn, 128)
    tk = _pick_block(K, tk, 128)
    grid = (M // tm, N // tn, K // tk)
    return pl.pallas_call(
        matmul_bias_kernel,
        out_shape=jax.ShapeDtypeStruct((M, N), jnp.float32),
        grid_spec=pltpu.PrefetchScalarGridSpec(
            num_scalar_prefetch=0,
            grid=grid,
            in_specs=[
                pl.BlockSpec((tm, tk), lambda i, j, k: (i, k)),
                pl.BlockSpec((tk, tn), lambda i, j, k: (k, j)),
                pl.BlockSpec((1, tn), lambda i, j, k: (0, j)),
            ],
            out_specs=pl.BlockSpec((tm, tn), lambda i, j, k: (i, j)),
            scratch_shapes=[pltpu.VMEM((tm, tn), jnp.float32)],
        ),
        compiler_params=pltpu.CompilerParams(
            dimension_semantics=("parallel", "parallel", "arbitrary"),
            vmem_limit_bytes=64 * 1024 * 1024),
    )(x, w_t, b_row)


# ----------------------------------------------------------------------------
# LSTM recurrence kernel.  Input gates are precomputed (hoisted projection);
# each grid step consumes a chunk of Tc timesteps, h/c carried in VMEM scratch.
# ----------------------------------------------------------------------------
def lstm_recurrence_kernel(gx_ref, whh_ref, h0_ref, c0_ref,
                           y_ref, hT_ref, cT_ref, h_sc, c_sc):
    chunk = pl.program_id(0)
    H = h_sc.shape[1]
    Tc = gx_ref.shape[0]

    # Initial state on the first chunk (scratch persists across grid iterations).
    @pl.when(chunk == 0)
    def _():
        h_sc[...] = h0_ref[...]
        c_sc[...] = c0_ref[...]

    @pl.loop(0, Tc, unroll=True)
    def _(t):
        h = h_sc[...]
        c = c_sc[...]
        # gates = gates_x[t] + h @ W_hh^T   (W_hh pre-transposed; both biases
        # already folded into gates_x by the hoisted projection)
        gates = gx_ref[t] + jnp.dot(h, whh_ref[...],
                                    preferred_element_type=jnp.float32)
        # PyTorch gate order: i, f, g, o
        i_g = jax.nn.sigmoid(gates[:, 0 * H:1 * H])
        f_g = jax.nn.sigmoid(gates[:, 1 * H:2 * H])
        g_g = jnp.tanh(gates[:, 2 * H:3 * H])
        o_g = jax.nn.sigmoid(gates[:, 3 * H:4 * H])
        c_new = f_g * c + i_g * g_g
        h_new = o_g * jnp.tanh(c_new)
        h_sc[...] = h_new
        c_sc[...] = c_new
        y_ref[t] = h_new.astype(y_ref.dtype)

    @pl.when(chunk == pl.num_programs(0) - 1)
    def _():
        hT_ref[...] = h_sc[...].astype(hT_ref.dtype)
        cT_ref[...] = c_sc[...].astype(cT_ref.dtype)


def lstm_recurrence(gates_x_tbg, w_hh_t, h0, c0):
    """gates_x_tbg: (T, B, 4H) time-major precomputed input gates (biases folded in).
    w_hh_t: (H, 4H).  h0, c0: (B, H) initial state.
    Returns (y (T,B,H), h_T (B,H), c_T (B,H))."""
    T, B, G = gates_x_tbg.shape
    H = G // 4
    Tc = _pick_time_chunk(T, B, G)
    return pl.pallas_call(
        lstm_recurrence_kernel,
        out_shape=(jax.ShapeDtypeStruct((T, B, H), jnp.float32),
                   jax.ShapeDtypeStruct((B, H), jnp.float32),
                   jax.ShapeDtypeStruct((B, H), jnp.float32)),
        grid_spec=pltpu.PrefetchScalarGridSpec(
            num_scalar_prefetch=0,
            grid=(T // Tc,),
            in_specs=[
                pl.BlockSpec((Tc, B, G), lambda t: (t, 0, 0)),   # gates_x chunk
                pl.BlockSpec((H, G), lambda t: (0, 0)),          # W_hh^T (VMEM-resident)
                pl.BlockSpec((B, H), lambda t: (0, 0)),          # h0
                pl.BlockSpec((B, H), lambda t: (0, 0)),          # c0
            ],
            out_specs=(
                pl.BlockSpec((Tc, B, H), lambda t: (t, 0, 0)),   # y chunk (slab store)
                pl.BlockSpec((B, H), lambda t: (0, 0)),          # h_T
                pl.BlockSpec((B, H), lambda t: (0, 0)),          # c_T
            ),
            scratch_shapes=[pltpu.VMEM((B, H), jnp.float32),
                            pltpu.VMEM((B, H), jnp.float32)],
        ),
        compiler_params=pltpu.CompilerParams(
            # Time axis is a true recurrence: must stay "arbitrary".
            dimension_semantics=("arbitrary",),
            vmem_limit_bytes=64 * 1024 * 1024),
    )(gates_x_tbg, w_hh_t, h0, c0)


# ----------------------------------------------------------------------------
# Parameter init (deterministic, matches shapes/init style of the PyTorch module).
# ----------------------------------------------------------------------------
def init_params(key, ntoken, ninp, nhid, nlayers):
    initrange = 0.1
    stdv = 1.0 / math.sqrt(nhid)
    keys = iter(jax.random.split(key, 2 + 4 * nlayers + 1))
    params = {}
    params["enc_w"] = jax.random.uniform(next(keys), (ntoken, ninp),
                                         jnp.float32, -initrange, initrange)
    lstm = []
    for layer in range(nlayers):
        din = ninp if layer == 0 else nhid
        w_ih = jax.random.uniform(next(keys), (4 * nhid, din), jnp.float32, -stdv, stdv)
        w_hh = jax.random.uniform(next(keys), (4 * nhid, nhid), jnp.float32, -stdv, stdv)
        b_ih = jax.random.uniform(next(keys), (4 * nhid,), jnp.float32, -stdv, stdv)
        b_hh = jax.random.uniform(next(keys), (4 * nhid,), jnp.float32, -stdv, stdv)
        lstm.append((w_ih, w_hh, b_ih, b_hh))
    params["lstm"] = lstm
    params["dec_w"] = jax.random.uniform(next(keys), (ntoken, nhid),
                                         jnp.float32, -initrange, initrange)
    params["dec_b"] = jnp.zeros((ntoken,), jnp.float32)  # deterministic bias
    return params


# ----------------------------------------------------------------------------
# Full forward (labels=None; eval-mode dropout = identity; hidden optional).
# ----------------------------------------------------------------------------
def rnn_model_forward(params, input_ids, nhid, nlayers, hidden=None):
    B, T = input_ids.shape
    ntoken = params["dec_w"].shape[0]

    # Embedding lookup directly in time-major order (gather is glue-JAX).
    emb_tbd = jnp.take(params["enc_w"], jnp.transpose(input_ids), axis=0)  # (T, B, ninp)
    x_flat = emb_tbd.reshape(T * B, -1)

    h_fin, c_fin = [], []
    for layer in range(nlayers):
        w_ih, w_hh, b_ih, b_hh = params["lstm"][layer]
        if hidden is None:
            h0 = jnp.zeros((B, nhid), jnp.float32)
            c0 = jnp.zeros((B, nhid), jnp.float32)
        else:
            h0 = hidden[0][layer]
            c0 = hidden[1][layer]
        # Hoisted input projection: one tiled MXU matmul over all timesteps.
        gates_x = matmul_bias(x_flat, jnp.transpose(w_ih),
                              (b_ih + b_hh)[None, :])            # (T*B, 4H)
        gates_x = gates_x.reshape(T, B, 4 * nhid)
        y, hT, cT = lstm_recurrence(gates_x, jnp.transpose(w_hh), h0, c0)
        x_flat = y.reshape(T * B, nhid)
        h_fin.append(hT)
        c_fin.append(cT)
        # inter-layer dropout: identity (eval mode)

    # Decoder consumes the flat time-major activations; transpose only the
    # final logits back to batch_first.
    logits_flat = matmul_bias(x_flat, jnp.transpose(params["dec_w"]),
                              params["dec_b"][None, :])          # (T*B, ntoken)
    logits = jnp.transpose(logits_flat.reshape(T, B, ntoken), (1, 0, 2))
    hidden_out = (jnp.stack(h_fin, axis=0), jnp.stack(c_fin, axis=0))
    return logits, hidden_out


# ----------------------------------------------------------------------------
# Pure-JAX reference (for correctness sanity check).
# ----------------------------------------------------------------------------
def reference_forward(params, input_ids, nhid, nlayers, hidden=None):
    B, T = input_ids.shape
    emb = jnp.take(params["enc_w"], input_ids, axis=0)
    inp = emb
    h_fin, c_fin = [], []
    for layer in range(nlayers):
        w_ih, w_hh, b_ih, b_hh = params["lstm"][layer]
        if hidden is None:
            h = jnp.zeros((B, nhid), jnp.float32)
            c = jnp.zeros((B, nhid), jnp.float32)
        else:
            h = hidden[0][layer]
            c = hidden[1][layer]
        ys = []
        for t in range(T):
            g = inp[:, t, :] @ w_ih.T + b_ih + h @ w_hh.T + b_hh
            ig, fg, gg, og = jnp.split(g, 4, axis=-1)
            ig, fg, gg, og = (jax.nn.sigmoid(ig), jax.nn.sigmoid(fg),
                              jnp.tanh(gg), jax.nn.sigmoid(og))
            c = fg * c + ig * gg
            h = og * jnp.tanh(c)
            ys.append(h)
        inp = jnp.stack(ys, axis=1)
        h_fin.append(h)
        c_fin.append(c)
    logits = inp @ params["dec_w"].T + params["dec_b"]
    return logits, (jnp.stack(h_fin), jnp.stack(c_fin))


if __name__ == "__main__":
    ntoken, ninp, nhid, nlayers = 50, 32, 32, 2
    B, T = 2, 8

    key = jax.random.PRNGKey(0)
    kp, kx = jax.random.split(key)
    params = init_params(kp, ntoken, ninp, nhid, nlayers)
    input_ids = jax.random.randint(kx, (B, T), 0, ntoken, dtype=jnp.int32)

    # hidden=None path (the module's default forward path)
    logits, (h_n, c_n) = rnn_model_forward(params, input_ids, nhid, nlayers)
    jax.block_until_ready((logits, h_n, c_n))

    ref_logits, (ref_h, ref_c) = reference_forward(params, input_ids, nhid, nlayers)
    np.testing.assert_allclose(np.asarray(logits), np.asarray(ref_logits),
                               atol=2e-3, rtol=2e-3)
    np.testing.assert_allclose(np.asarray(h_n), np.asarray(ref_h),
                               atol=2e-3, rtol=2e-3)
    np.testing.assert_allclose(np.asarray(c_n), np.asarray(ref_c),
                               atol=2e-3, rtol=2e-3)

    # explicit-hidden path (module's `hidden is not None` branch)
    hidden0 = (0.05 * jnp.ones((nlayers, B, nhid), jnp.float32),
               -0.05 * jnp.ones((nlayers, B, nhid), jnp.float32))
    logits2, (h2, c2) = rnn_model_forward(params, input_ids, nhid, nlayers,
                                          hidden=hidden0)
    jax.block_until_ready((logits2, h2, c2))
    ref2_logits, (ref2_h, ref2_c) = reference_forward(params, input_ids, nhid,
                                                      nlayers, hidden=hidden0)
    np.testing.assert_allclose(np.asarray(logits2), np.asarray(ref2_logits),
                               atol=2e-3, rtol=2e-3)
    np.testing.assert_allclose(np.asarray(h2), np.asarray(ref2_h),
                               atol=2e-3, rtol=2e-3)
    np.testing.assert_allclose(np.asarray(c2), np.asarray(ref2_c),
                               atol=2e-3, rtol=2e-3)

    assert logits.shape == (B, T, ntoken)
    assert h_n.shape == (nlayers, B, nhid) and c_n.shape == (nlayers, B, nhid)
    print("KERNEL_OK")
</pallas_src>

<mosaic_0001>
module attributes {stable_mosaic.version = 11 : i64} {
  func.func @matmul_bias_kernel(%arg0: i32, %arg1: i32, %arg2: i32, %arg3: memref<16x32xf32, #tpu.memory_space<vmem>>, %arg4: memref<32x128xf32, #tpu.memory_space<vmem>>, %arg5: memref<1x128xf32, #tpu.memory_space<vmem>>, %arg6: memref<16x128xf32, #tpu.memory_space<vmem>>, %arg7: memref<16x128xf32, #tpu.memory_space<vmem>>) attributes {dimension_semantics = [#tpu.dimension_semantics<parallel>, #tpu.dimension_semantics<parallel>, #tpu.dimension_semantics<arbitrary>], iteration_bounds = array<i64: 1, 1, 1>, scalar_prefetch = 0 : i64, scratch_operands = 1 : i64, tpu.core_type = #tpu.core_type<tc>, window_params = [{transform_indices = @transform_0, window_bounds = array<i64: 16, 32>}, {transform_indices = @transform_1, window_bounds = array<i64: 32, 128>}, {transform_indices = @transform_2, window_bounds = array<i64: 1, 128>}, {transform_indices = @transform_3, window_bounds = array<i64: 16, 128>}]} {
    %c0_i32 = arith.constant 0 : i32
    %0 = arith.cmpi eq, %arg2, %c0_i32 : i32
    %1 = arith.extui %0 : i1 to i32
    %c0_i32_0 = arith.constant 0 : i32
    %2 = arith.cmpi ne, %1, %c0_i32_0 : i32
    scf.if %2 {
      %cst_10 = arith.constant 0.000000e+00 : f32
      %12 = vector.broadcast %cst_10 : f32 to vector<16x128xf32>
      %c0_11 = arith.constant 0 : index
      %c0_12 = arith.constant 0 : index
      %13 = vector.load %arg7[%c0_11, %c0_12] : memref<16x128xf32, #tpu.memory_space<vmem>>, vector<16x128xf32>
      tpu.vector_store %arg7[%c0_11, %c0_12], %12 {strides = array<i32>} : memref<16x128xf32, #tpu.memory_space<vmem>>, vector<16x128xf32>,
    } else {
    }
    %c0 = arith.constant 0 : index
    %c0_1 = arith.constant 0 : index
    %3 = vector.load %arg7[%c0, %c0_1] : memref<16x128xf32, #tpu.memory_space<vmem>>, vector<16x128xf32>
    %c0_2 = arith.constant 0 : index
    %c0_3 = arith.constant 0 : index
    %4 = vector.load %arg3[%c0_2, %c0_3] : memref<16x32xf32, #tpu.memory_space<vmem>>, vector<16x32xf32>
    %c0_4 = arith.constant 0 : index
    %c0_5 = arith.constant 0 : index
    %5 = vector.load %arg4[%c0_4, %c0_5] : memref<32x128xf32, #tpu.memory_space<vmem>>, vector<32x128xf32>
    %cst = arith.constant dense<0.000000e+00> : vector<16x128xf32>
    %6 = tpu.matmul %4, %5, %cst {dimension_numbers = #tpu.dot_dimension_numbers<[1], [0], [0], [1], [0, 0, 1, 1], [], []>} : vector<16x32xf32>, vector<32x128xf32>, vector<16x128xf32> -> vector<16x128xf32>
    %7 = arith.addf %3, %6 : vector<16x128xf32>
    %c0_6 = arith.constant 0 : index
    %c0_7 = arith.constant 0 : index
    %8 = vector.load %arg7[%c0_6, %c0_7] : memref<16x128xf32, #tpu.memory_space<vmem>>, vector<16x128xf32>
    tpu.vector_store %arg7[%c0_6, %c0_7], %7 {strides = array<i32>} : memref<16x128xf32, #tpu.memory_space<vmem>>, vector<16x128xf32>,
    %c0_i32_8 = arith.constant 0 : i32
    %9 = arith.cmpi eq, %arg2, %c0_i32_8 : i32
    %10 = arith.extui %9 : i1 to i32
    %c0_i32_9 = arith.constant 0 : i32
    %11 = arith.cmpi ne, %10, %c0_i32_9 : i32
    scf.if %11 {
      %c0_10 = arith.constant 0 : index
      %c0_11 = arith.constant 0 : index
      %12 = vector.load %arg7[%c0_10, %c0_11] : memref<16x128xf32, #tpu.memory_space<vmem>>, vector<16x128xf32>
      %c0_12 = arith.constant 0 : index
      %c0_13 = arith.constant 0 : index
      %13 = vector.load %arg5[%c0_12, %c0_13] : memref<1x128xf32, #tpu.memory_space<vmem>>, vector<1x128xf32>
      %14 = vector.broadcast %13 : vector<1x128xf32> to vector<16x128xf32>
      %15 = arith.addf %12, %14 : vector<16x128xf32>
      %c0_14 = arith.constant 0 : index
      %c0_15 = arith.constant 0 : index
      %16 = vector.load %arg6[%c0_14, %c0_15] : memref<16x128xf32, #tpu.memory_space<vmem>>, vector<16x128xf32>
      tpu.vector_store %arg6[%c0_14, %c0_15], %15 {strides = array<i32>} : memref<16x128xf32, #tpu.memory_space<vmem>>, vector<16x128xf32>,
    } else {
    }
    return
  }
  func.func @transform_0(%arg0: i32, %arg1: i32, %arg2: i32) -> (i32, i32) {
    %c0_i32 = arith.constant 0 : i32
    return %arg0, %arg2 : i32, i32
  }
  func.func @transform_1(%arg0: i32, %arg1: i32, %arg2: i32) -> (i32, i32) {
    %c0_i32 = arith.constant 0 : i32
    return %arg2, %arg1 : i32, i32
  }
  func.func @transform_2(%arg0: i32, %arg1: i32, %arg2: i32) -> (i32, i32) {
    %c0_i32 = arith.constant 0 : i32
    %c0_i32_0 = arith.constant 0 : i32
    return %c0_i32, %arg1 : i32, i32
  }
  func.func @transform_3(%arg0: i32, %arg1: i32, %arg2: i32) -> (i32, i32) {
    %c0_i32 = arith.constant 0 : i32
    return %arg0, %arg1 : i32, i32
  }
}

</mosaic_0001>

<llo_original>
// kernel: tpu_custom_call.1
$region0: #{tpu_custom_call.1}
  #allocation0 [shape = 'u32[]', space=smem, size = 0x4, offset = 0x4, fixed_abs, tag = 'smem constant byte address 0x4 - core index']
  #allocation1 [shape = 'u32[144,128]{1,0:T(1,128)}', space=vmem, size = 0x12000, scoped, tag = 'internal scratch']
  #allocation2 [shape = 'f32[16,128]{1,0:T(8,128)}', space=vmem, size = 0x2000, scoped, tag = 'scratch operand']
  %s0 = inlined_call_operand.hbm [shape: f32[16,32], index: 0, kind: input, shape index: {}]
  %s1 = inlined_call_operand.hbm [shape: f32[32,128], index: 1, kind: input, shape index: {}]
  %s2 = inlined_call_operand.hbm [shape: f32[1,128], index: 2, kind: input, shape index: {}]
  %s3 = inlined_call_operand.hbm [shape: f32[16,128], index: 3, kind: output, shape index: {}]
  %s4 = sld [smem:[#allocation0]]
  $region42: #{tpu_custom_call.1} parent=0
    _
  %s6 = ssub.s32 1, %s4
  %s7 = scalar_select 0, %s6, %s4
  $region1: #{tpu_custom_call.1} parent=0
    #allocation3 [shape = 'u8[8192]{0}', space=vmem, size = 0x2000, scoped, tag = 'input window, operand 0, single buffered']
    #allocation4 [shape = 's32[1]{0}', space=sflag, size = 0x4, scoped, tag = 'scoped memory for tpu_custom_call.1']
    #allocation5 [shape = 's32[1]{0}', space=sflag, size = 0x4, scoped, tag = 'scoped memory for tpu_custom_call.1']
    #allocation6 [shape = 'u8[16384]{0}', space=vmem, size = 0x4000, scoped, tag = 'input window, operand 1, single buffered']
    #allocation7 [shape = 's32[1]{0}', space=sflag, size = 0x4, scoped, tag = 'scoped memory for tpu_custom_call.1']
    #allocation8 [shape = 'u8[512]{0}', space=vmem, size = 0x400, scoped, tag = 'input window, operand 2, single buffered']
    #allocation9 [shape = 'u8[8192]{0}', space=vmem, size = 0x2000, scoped, tag = 'output window, operand 0, single buffered']
    %8 = vsyncpa [#allocation4], 0
    %9 = vsyncpa [#allocation7], 0
    %10 = vsyncpa [#allocation5], 0
    // Predicated region
    $region2: #{tpu_custom_call.1} parent=1 // pred_check
      _
    $region3: #{tpu_custom_call.1} parent=1 // pred_check_branch
      %12 = sbr.rel (0) target = $region5
    $region4: #{tpu_custom_call.1} parent=1 // pred_region
      %s14 = ssub.s32 256, 256
      %15 = vsyncadd [#allocation4], %s14
      %s16 = sshll.u32 [#allocation3], 4
      %s17 = int_to_ptr.vmem [resolvable:$true] %s16
      %22 = dma.hbm_to_vmem [thread:$0]  %s0, 256, %s17, [#allocation4], 128, 128, 8
    $region5: #{tpu_custom_call.1} parent=1 // pred_fallthru
      _
    // Predicated region
    $region6: #{tpu_custom_call.1} parent=1 // pred_check
      _
    $region7: #{tpu_custom_call.1} parent=1 // pred_check_branch
      %24 = sbr.rel (0) target = $region9
    $region8: #{tpu_custom_call.1} parent=1 // pred_region
      %s26 = ssub.s32 512, 512
      %27 = vsyncadd [#allocation7], %s26
      %s28 = sshll.u32 [#allocation6], 4
      %s29 = int_to_ptr.vmem [resolvable:$true] %s28
      %34 = dma.hbm_to_vmem [thread:$0]  %s1, 512, %s29, [#allocation7], 128, 128, 8
    $region9: #{tpu_custom_call.1} parent=1 // pred_fallthru
      _
    // Predicated region
    $region10: #{tpu_custom_call.1} parent=1 // pred_check
      _
    $region11: #{tpu_custom_call.1} parent=1 // pred_check_branch
      %36 = sbr.rel (0) target = $region13
    $region12: #{tpu_custom_call.1} parent=1 // pred_region
      %s38 = ssub.s32 16, 16
      %39 = vsyncadd [#allocation7], %s38
      %s41 = sshll.u32 [#allocation8], 4
      %s42 = int_to_ptr.vmem [resolvable:$true] %s41
      %44 = dma.hbm_to_vmem [thread:$0]  %s2, 16, %s42, [#allocation7]
    $region13: #{tpu_custom_call.1} parent=1 // pred_fallthru
      _
    // Predicated region
    $region14: #{tpu_custom_call.1} parent=1 // pred_check
      _
    $region15: #{tpu_custom_call.1} parent=1 // pred_check_branch
      %46 = sbr.rel (0) target = $region17
    $region16: #{tpu_custom_call.1} parent=1 // pred_region
      %47 = dma.done [#allocation4], 256
    $region17: #{tpu_custom_call.1} parent=1 // pred_fallthru
      _
    // Predicated region
    $region18: #{tpu_custom_call.1} parent=1 // pred_check
      _
    $region19: #{tpu_custom_call.1} parent=1 // pred_check_branch
      %49 = sbr.rel (0) target = $region21
    $region20: #{tpu_custom_call.1} parent=1 // pred_region
      %50 = dma.done [#allocation7], 512
    $region21: #{tpu_custom_call.1} parent=1 // pred_fallthru
      _
    // Predicated region
    $region22: #{tpu_custom_call.1} parent=1 // pred_check
      _
    $region23: #{tpu_custom_call.1} parent=1 // pred_check_branch
      %52 = sbr.rel (0) target = $region25
    $region24: #{tpu_custom_call.1} parent=1 // pred_region
      %53 = dma.done [#allocation7], 16
    $region25: #{tpu_custom_call.1} parent=1 // pred_fallthru
      _
    %p54 = scmp.eq.s32.totalorder 0, 0
    // Predicated region
    $region26: #{tpu_custom_call.1} parent=1 // pred_check
      %p55 = pneg %p54
    $region27: #{tpu_custom_call.1} parent=1 // pred_check_branch
      %57 = sbr.rel (%p55) target = $region29
    $region28: #{tpu_custom_call.1} parent=1 // pred_region
      %58 = vst [vmem:[#allocation2] sm:$0xff] 0.0
      %59 = vst [vmem:[#allocation2 + $0x8] sm:$0xff] 0.0
    $region29: #{tpu_custom_call.1} parent=1 // pred_fallthru
      _
    %v60 = vld [vmem:[#allocation2] sm:$0xff]
    %v61 = vld [vmem:[#allocation2 + $0x8] sm:$0xff]
    %v62 = vld [vmem:[#allocation3] sm:$0xff]
    %v63 = vld [vmem:[#allocation3 + $0x8] sm:$0xff]
    %v64 = vld [vmem:[#allocation6] sm:$0xff]
    %v65 = vld [vmem:[#allocation6 + $0x8] sm:$0xff]
    %v66 = vld [vmem:[#allocation6 + $0x10] sm:$0xff]
    %v67 = vld [vmem:[#allocation6 + $0x18] sm:$0xff]
    %vm68 = vcmask 261120
    %v70 = vsel %vm68, %v62, 0
    %v73 = vsel %vm68, %v63, 0
    %75 = vmatprep.subr.mxu0 0.0
    %76 = vmatpush1.msra.mxu0 %v64
    %77 = vmatprep.subr.mxu0 0.0
    %78 = vmatpush1.msra.mxu0 %v65
    %79 = vmatprep.subr.mxu0 0.0
    %80 = vmatpush1.msra.mxu0 %v66
    %81 = vmatprep.subr.mxu0 0.0
    %82 = vmatpush1.msra.mxu0 %v67
    %83 = vmatprep.subr.mxu0 0.0
    %84 = vmatpush1.msra.mxu0 0.0
    %85 = vmatprep.subr.mxu0 0.0
    %86 = vmatpush1.msra.mxu0 0.0
    %87 = vmatprep.subr.mxu0 0.0
    %88 = vmatpush1.msra.mxu0 0.0
    %89 = vmatprep.subr.mxu0 0.0
    %90 = vmatpush1.msra.mxu0 0.0
    %91 = vmatprep.subr.mxu0 0.0
    %92 = vmatpush1.msra.mxu0 0.0
    %93 = vmatprep.subr.mxu0 0.0
    %94 = vmatpush1.msra.mxu0 0.0
    %95 = vmatprep.subr.mxu0 0.0
    %96 = vmatpush1.msra.mxu0 0.0
    %97 = vmatprep.subr.mxu0 0.0
    %98 = vmatpush1.msra.mxu0 0.0
    %99 = vmatprep.subr.mxu0 0.0
    %100 = vmatpush1.msra.mxu0 0.0
    %101 = vmatprep.subr.mxu0 0.0
    %102 = vmatpush1.msra.mxu0 0.0
    %103 = vmatprep.subr.mxu0 0.0
    %104 = vmatpush1.msra.mxu0 0.0
    %105 = vmatprep.subr.mxu0 0.0
    %106 = vmatpush1.msra.mxu0 0.0
    %107 = vmatprep.subr.mxu0 0.0
    %108 = vmatpush1.msra.mxu0 0.0
    %109 = vmatprep.subr.mxu0 0.0
    %110 = vmatpush1.msra.mxu0 0.0
    %111 = vmatprep.subr.mxu0 0.0
    %112 = vmatpush1.msra.mxu0 0.0
    %113 = vmatprep.subr.mxu0 0.0
    %114 = vmatpush1.msra.mxu0 0.0
    %115 = vmatprep.subr.mxu0 0.0
    %116 = vmatpush1.msra.mxu0 0.0
    %117 = vmatprep.subr.mxu0 0.0
    %118 = vmatpush1.msra.mxu0 0.0
    %119 = vmatprep.subr.mxu0 0.0
    %120 = vmatpush1.msra.mxu0 0.0
    %121 = vmatprep.subr.mxu0 0.0
    %122 = vmatpush1.msra.mxu0 0.0
    %123 = vmatprep.subr.mxu0 0.0
    %124 = vmatpush1.msra.mxu0 0.0
    %125 = vmatprep.subr.mxu0 0.0
    %126 = vmatpush1.msra.mxu0 0.0
    %127 = vmatprep.subr.mxu0 0.0
    %128 = vmatpush1.msra.mxu0 0.0
    %129 = vmatprep.subr.mxu0 0.0
    %130 = vmatpush1.msra.mxu0 0.0
    %131 = vmatprep.subr.mxu0 0.0
    %132 = vmatpush1.msra.mxu0 0.0
    %133 = vmatprep.subr.mxu0 0.0
    %134 = vmatpush1.msra.mxu0 0.0
    %135 = vmatprep.subr.mxu0 0.0
    %136 = vmatpush1.msra.mxu0 0.0
    %137 = vmatprep.subr.mxu0 0.0
    %138 = vmatpush1.msra.mxu0 0.0
    %139 = vmatprep.mubr.f32.mxu0 0.0
    %140 = vmatmul.mubr.f32.gmra.mrb[0].mxu0 %v70
    %v141 = vpop.f32.mrb[0].mxu0
    %v142 = vadd.f32 0.0, %v141
    %v143 = vpop.f32.mrb[0].mxu0
    %144 = vmatprep.mubr.f32.mxu0 0.0
    %145 = vmatmul.mubr.f32.gmra.mrb[0].mxu0 %v73
    %v146 = vpop.f32.mrb[0].mxu0
    %v147 = vadd.f32 0.0, %v146
    %v148 = vpop.f32.mrb[0].mxu0
    %149 = vdwg.mxu0
    %v150 = vadd.f32 %v60, %v142
    %v151 = vadd.f32 %v61, %v147
    %152 = vst [vmem:[#allocation2] sm:$0xff] %v150
    %153 = vst [vmem:[#allocation2 + $0x8] sm:$0xff] %v151
    // Predicated region
    $region30: #{tpu_custom_call.1} parent=1 // pred_check
      %p154 = pneg %p54
    $region31: #{tpu_custom_call.1} parent=1 // pred_check_branch
      %156 = sbr.rel (%p154) target = $region33
    $region32: #{tpu_custom_call.1} parent=1 // pred_region
      %v157 = vld [vmem:[#allocation2] sm:$0xff]
      %v158 = vld [vmem:[#allocation2 + $0x8] sm:$0xff]
      %v159 = vld [vmem:[#allocation8] sm:$0x1]
      %v161 = vlaneseq
      %v162 = vshrl.u32 %v161, 7
      %v163 = vsub.s32 0, %v162
      %v164 = vrot.slane %v159, %v163
      %v166 = vadd.f32 %v157, %v164
      %v167 = vadd.f32 %v158, %v164
      %168 = vst [vmem:[#allocation9] sm:$0xff] %v166
      %169 = vst [vmem:[#allocation9 + $0x8] sm:$0xff] %v167
    $region33: #{tpu_custom_call.1} parent=1 // pred_fallthru
      _
    // Predicated region
    $region34: #{tpu_custom_call.1} parent=1 // pred_check
      _
    $region35: #{tpu_custom_call.1} parent=1 // pred_check_branch
      %171 = sbr.rel (0) target = $region37
    $region36: #{tpu_custom_call.1} parent=1 // pred_region
      %s173 = ssub.s32 256, 256
      %174 = vsyncadd [#allocation5], %s173
      %s175 = sshll.u32 [#allocation9], 4
      %s176 = int_to_ptr.vmem [resolvable:$true] %s175
      %181 = dma.vmem_to_hbm [thread:$0]  %s176, 256, %s3, [#allocation5], 128, 128, 8
    $region37: #{tpu_custom_call.1} parent=1 // pred_fallthru
      _
    // Predicated region
    $region38: #{tpu_custom_call.1} parent=1 // pred_check
      _
    $region39: #{tpu_custom_call.1} parent=1 // pred_check_branch
      %183 = sbr.rel (0) target = $region41
    $region40: #{tpu_custom_call.1} parent=1 // pred_region
      %184 = dma.done [#allocation5], 256
    $region41: #{tpu_custom_call.1} parent=1 // pred_fallthru
      _
    %185 = vsyncpa [#allocation4], 1
    %186 = vsyncpa [#allocation7], 1
    %187 = vsyncpa [#allocation5], 1

</llo_original>
